<compile_context>
chip_gen: v7x
topology: tpu7x:2x2x1
jax: 0.10.0
libtpu: 0.0.40
codegen_flags: <defaults>
</compile_context>

<pallas_src>
import jax
import jax.numpy as jnp
from jax import lax
from jax.experimental import pallas as pl
from jax.experimental.pallas import tpu as pltpu

EPS = 1e-6


# ------------------------------ Pallas kernel ------------------------------
def iou_kernel(y_pred_ref, y_true_ref, iou_ref):
    logits = y_pred_ref[0]                       # (C, HW) f32
    labels = y_true_ref[0]                       # (1, HW) i32
    C, HW = logits.shape

    # Numerically stable softmax over the class (sublane) axis.
    m = jnp.max(logits, axis=0, keepdims=True)   # (1, HW)
    e = jnp.exp(logits - m)                      # (C, HW)
    proba = e / jnp.sum(e, axis=0, keepdims=True)

    # One-hot(labels) built in-register (padded lanes carry label=-1 -> all 0).
    class_ids = lax.broadcasted_iota(jnp.int32, (C, HW), 0)
    onehot = (class_ids == labels).astype(jnp.float32)          # (C, HW)

    # Mask padded lanes out of the probability terms.
    valid = (labels >= 0).astype(jnp.float32)                   # (1, HW)
    pv = proba * valid                                          # (C, HW)

    inter = jnp.sum(pv * onehot, axis=1, keepdims=True)         # (C, 1)
    sum_p2 = jnp.sum(pv * pv, axis=1, keepdims=True)            # (C, 1)
    count = jnp.sum(onehot, axis=1, keepdims=True)              # (C, 1) == sum onehot^2
    union = sum_p2 + count - inter
    iou_ref[0] = (inter + EPS) / (union + EPS)                  # (C, 1)


# ------------------------------- wrapper -----------------------------------
def iou_loss_pallas(y_pred: jnp.ndarray, y_true: jnp.ndarray) -> jnp.ndarray:
    """Equivalent of IoULoss()(y_pred, y_true)."""
    y_pred = jnp.asarray(y_pred, jnp.float32)
    y_true = jnp.asarray(y_true)

    # Reference 5-D path: flatten the trailing two dims.
    if y_pred.ndim == 5:
        y_pred = y_pred.reshape(*y_pred.shape[:-2], -1)
        y_true = y_true.reshape(*y_true.shape[:-2], -1)
    # Reference squeezes a singleton channel dim on y_true if present.
    if y_true.ndim == y_pred.ndim and y_true.shape[1] == 1:
        y_true = jnp.squeeze(y_true, axis=1)

    B, C = y_pred.shape[0], y_pred.shape[1]
    hw = 1
    for d in y_pred.shape[2:]:
        hw *= d

    p = y_pred.reshape(B, C, hw)
    t = y_true.reshape(B, 1, hw).astype(jnp.int32)

    # Pad the lane axis to a multiple of 128 (lane-dense layout); padded
    # labels are -1 so they are masked out inside the kernel.
    hw_pad = ((hw + 127) // 128) * 128
    if hw_pad != hw:
        p = jnp.pad(p, ((0, 0), (0, 0), (0, hw_pad - hw)))
        t = jnp.pad(t, ((0, 0), (0, 0), (0, hw_pad - hw)), constant_values=-1)

    iou = pl.pallas_call(
        iou_kernel,
        out_shape=jax.ShapeDtypeStruct((B, C, 1), jnp.float32),
        grid=(B,),
        in_specs=[
            pl.BlockSpec((1, C, hw_pad), lambda b: (b, 0, 0)),   # logits plane
            pl.BlockSpec((1, 1, hw_pad), lambda b: (b, 0, 0)),   # labels plane
        ],
        out_specs=pl.BlockSpec((1, C, 1), lambda b: (b, 0, 0)),  # per-(b,c) IoU
        compiler_params=pltpu.CompilerParams(
            dimension_semantics=("parallel",)),
    )(p, t)

    return -jnp.mean(iou)


# --------------------------- pure-JAX reference -----------------------------
def iou_loss_reference(y_pred, y_true):
    y_pred = y_pred.astype(jnp.float32)
    num_classes = y_pred.shape[1]
    onehot = jax.nn.one_hot(y_true, num_classes, dtype=jnp.float32)   # (B,H,W,C)
    onehot = jnp.transpose(onehot, (0, 3, 1, 2))                      # (B,C,H,W)
    proba = jax.nn.softmax(y_pred, axis=1)
    intersection = jnp.sum(proba * onehot, axis=(2, 3))
    union = jnp.sum(proba ** 2 + onehot ** 2, axis=(2, 3)) - intersection
    iou = (intersection + EPS) / (union + EPS)
    return -jnp.mean(iou)


if __name__ == "__main__":
    key = jax.random.PRNGKey(0)
    k1, k2 = jax.random.split(key)
    B, C, H, W = 2, 4, 16, 16
    y_pred = jax.random.normal(k1, (B, C, H, W), dtype=jnp.float32)
    y_true = jax.random.randint(k2, (B, H, W), 0, C, dtype=jnp.int32)

    result = jax.block_until_ready(iou_loss_pallas(y_pred, y_true))
    ref = jax.block_until_ready(iou_loss_reference(y_pred, y_true))

    assert jnp.isfinite(result), "IoU loss is not finite"
    assert abs(float(result) - float(ref)) < 1e-5, (float(result), float(ref))
    print("KERNEL_OK")
</pallas_src>

<mosaic_0001>
module attributes {stable_mosaic.version = 11 : i64} {
  func.func @iou_kernel(%arg0: i32, %arg1: memref<1x4x256xf32, #tpu.memory_space<vmem>>, %arg2: memref<1x1x256xi32, #tpu.memory_space<vmem>>, %arg3: memref<1x4x1xf32, #tpu.memory_space<vmem>>) attributes {dimension_semantics = [#tpu.dimension_semantics<parallel>], iteration_bounds = array<i64: 2>, scalar_prefetch = 0 : i64, scratch_operands = 0 : i64, tpu.core_type = #tpu.core_type<tc>, window_params = [{transform_indices = @transform_0, window_bounds = array<i64: 1, 4, 256>}, {transform_indices = @transform_1, window_bounds = array<i64: 1, 1, 256>}, {transform_indices = @transform_2, window_bounds = array<i64: 1, 4, 1>}]} {
    %c0 = arith.constant 0 : index
    %c0_0 = arith.constant 0 : index
    %c0_1 = arith.constant 0 : index
    %0 = vector.load %arg1[%c0, %c0_0, %c0_1] : memref<1x4x256xf32, #tpu.memory_space<vmem>>, vector<1x4x256xf32>
    %1 = vector.shape_cast %0 : vector<1x4x256xf32> to vector<4x256xf32>
    %c0_2 = arith.constant 0 : index
    %c0_3 = arith.constant 0 : index
    %c0_4 = arith.constant 0 : index
    %2 = vector.load %arg2[%c0_2, %c0_3, %c0_4] : memref<1x1x256xi32, #tpu.memory_space<vmem>>, vector<1x1x256xi32>
    %3 = vector.shape_cast %2 : vector<1x1x256xi32> to vector<1x256xi32>
    %cst = arith.constant dense<0xFF800000> : vector<256xf32>
    %4 = vector.multi_reduction <maximumf>, %1, %cst [0] : vector<4x256xf32> to vector<256xf32>
    %5 = vector.shape_cast %4 : vector<256xf32> to vector<1x256xf32>
    %6 = vector.broadcast %5 : vector<1x256xf32> to vector<4x256xf32>
    %7 = arith.subf %1, %6 : vector<4x256xf32>
    %8 = math.exp %7 : vector<4x256xf32>
    %cst_5 = arith.constant dense<0.000000e+00> : vector<256xf32>
    %9 = vector.multi_reduction <add>, %8, %cst_5 [0] : vector<4x256xf32> to vector<256xf32>
    %10 = vector.shape_cast %9 : vector<256xf32> to vector<1x256xf32>
    %11 = vector.broadcast %10 : vector<1x256xf32> to vector<4x256xf32>
    %12 = arith.divf %8, %11 : vector<4x256xf32>
    %13 = tpu.iota {dimensions = array<i32: 0>} : vector<4x256xi32>
    %14 = vector.broadcast %3 : vector<1x256xi32> to vector<4x256xi32>
    %15 = arith.cmpi eq, %13, %14 : vector<4x256xi32>
    %16 = arith.extui %15 : vector<4x256xi1> to vector<4x256xi32>
    %17 = arith.sitofp %16 : vector<4x256xi32> to vector<4x256xf32>
    %c0_i32 = arith.constant 0 : i32
    %18 = vector.broadcast %c0_i32 : i32 to vector<1x256xi32>
    %19 = arith.cmpi sge, %3, %18 : vector<1x256xi32>
    %20 = arith.extui %19 : vector<1x256xi1> to vector<1x256xi32>
    %21 = arith.sitofp %20 : vector<1x256xi32> to vector<1x256xf32>
    %22 = vector.broadcast %21 : vector<1x256xf32> to vector<4x256xf32>
    %23 = arith.mulf %12, %22 : vector<4x256xf32>
    %24 = arith.mulf %23, %17 : vector<4x256xf32>
    %cst_6 = arith.constant dense<0.000000e+00> : vector<4xf32>
    %25 = vector.multi_reduction <add>, %24, %cst_6 [1] : vector<4x256xf32> to vector<4xf32>
    %26 = vector.shape_cast %25 : vector<4xf32> to vector<4x1xf32>
    %27 = arith.mulf %23, %23 : vector<4x256xf32>
    %cst_7 = arith.constant dense<0.000000e+00> : vector<4xf32>
    %28 = vector.multi_reduction <add>, %27, %cst_7 [1] : vector<4x256xf32> to vector<4xf32>
    %29 = vector.shape_cast %28 : vector<4xf32> to vector<4x1xf32>
    %cst_8 = arith.constant dense<0.000000e+00> : vector<4xf32>
    %30 = vector.multi_reduction <add>, %17, %cst_8 [1] : vector<4x256xf32> to vector<4xf32>
    %31 = vector.shape_cast %30 : vector<4xf32> to vector<4x1xf32>
    %32 = arith.addf %29, %31 : vector<4x1xf32>
    %33 = arith.subf %32, %26 : vector<4x1xf32>
    %cst_9 = arith.constant 9.99999997E-7 : f32
    %34 = vector.broadcast %cst_9 : f32 to vector<4x1xf32>
    %35 = arith.addf %26, %34 : vector<4x1xf32>
    %cst_10 = arith.constant 9.99999997E-7 : f32
    %36 = vector.broadcast %cst_10 : f32 to vector<4x1xf32>
    %37 = arith.addf %33, %36 : vector<4x1xf32>
    %38 = arith.divf %35, %37 : vector<4x1xf32>
    %c0_11 = arith.constant 0 : index
    %c0_12 = arith.constant 0 : index
    %c0_13 = arith.constant 0 : index
    %39 = vector.load %arg3[%c0_11, %c0_12, %c0_13] : memref<1x4x1xf32, #tpu.memory_space<vmem>>, vector<1x4x1xf32>
    %40 = vector.shape_cast %39 : vector<1x4x1xf32> to vector<4x1xf32>
    %41 = vector.shape_cast %38 : vector<4x1xf32> to vector<1x4x1xf32>
    tpu.vector_store %arg3[%c0_11, %c0_12, %c0_13], %41 {strides = array<i32>} : memref<1x4x1xf32, #tpu.memory_space<vmem>>, vector<1x4x1xf32>,
    return
  }
  func.func @transform_0(%arg0: i32) -> (i32, i32, i32) {
    %c0_i32 = arith.constant 0 : i32
    %c0_i32_0 = arith.constant 0 : i32
    %c0_i32_1 = arith.constant 0 : i32
    return %arg0, %c0_i32, %c0_i32_0 : i32, i32, i32
  }
  func.func @transform_1(%arg0: i32) -> (i32, i32, i32) {
    %c0_i32 = arith.constant 0 : i32
    %c0_i32_0 = arith.constant 0 : i32
    %c0_i32_1 = arith.constant 0 : i32
    return %arg0, %c0_i32, %c0_i32_0 : i32, i32, i32
  }
  func.func @transform_2(%arg0: i32) -> (i32, i32, i32) {
    %c0_i32 = arith.constant 0 : i32
    %c0_i32_0 = arith.constant 0 : i32
    %c0_i32_1 = arith.constant 0 : i32
    return %arg0, %c0_i32, %c0_i32_0 : i32, i32, i32
  }
}

</mosaic_0001>

<llo_original>
// kernel: tpu_custom_call.1
$region0: #{tpu_custom_call.1}
  #allocation0 [shape = 'u32[]', space=smem, size = 0x4, offset = 0x4, fixed_abs, tag = 'smem constant byte address 0x4 - core index']
  #allocation1 [shape = 'u32[144,128]{1,0:T(1,128)}', space=vmem, size = 0x12000, scoped, tag = 'internal scratch']
  %s0 = inlined_call_operand.hbm [shape: f32[2,4,256], index: 0, kind: input, shape index: {}]
  %s1 = inlined_call_operand.hbm [shape: s32[2,1,256], index: 1, kind: input, shape index: {}]
  %s2 = inlined_call_operand.vmem [shape: f32[2,4,1], index: 2, kind: output, shape index: {}]
  %s3 = sld [smem:[#allocation0]]
  $region49: #{tpu_custom_call.1} parent=0
    _
  %s5 = ssub.s32 1, %s3
  %s6 = scalar_select 0, %s5, %s3
  $region1: #{tpu_custom_call.1} parent=0
    #allocation2 [shape = 'u8[8192]{0}', space=vmem, size = 0x2000, scoped, tag = 'input window, operand 0']
    #allocation3 [shape = 's32[2]{0}', space=sflag, size = 0x8, scoped, tag = 'scoped memory for tpu_custom_call.1']
    #allocation4 [shape = 'u8[2048]{0}', space=vmem, size = 0x800, scoped, tag = 'input window, operand 1']
    #allocation5 [shape = 's32[2]{0}', space=sflag, size = 0x8, scoped, tag = 'scoped memory for tpu_custom_call.1']
    %7 = vsyncpa [#allocation3], 0
    %s8 = scalar_lea.sflag [#allocation3], 1
    %9 = vsyncpa %s8, 0
    %10 = vsyncpa [#allocation5], 0
    %s11 = scalar_lea.sflag [#allocation5], 1
    %12 = vsyncpa %s11, 0
    loop: start=0, step=1, limit=4
    $region2: #{tpu_custom_call.1} parent=1 // loop_pre_header
      _
    $region3: #{tpu_custom_call.1} parent=1 // loop_header
      %s14 = sphi 0, %s18
      %p15 = scmp.ge.s32.totalorder %s14, 4
      %s24 = sphi 0, %s26
      %s27 = sphi 0, %s24
      %s28 = sphi 0, %s27
      %s44 = sphi 0, %s28
      %s50 = sphi 0, %s52
      %s53 = sphi 0, %s50
      %s54 = sphi 0, %s53
      %s70 = sphi 0, %s54
      %s76 = sphi 0, %s78
      %s79 = sphi 0, %s76
      %s80 = sphi 0, %s79
      %s96 = sphi 0, %s80
    $region4: #{tpu_custom_call.1} parent=1 // loop_header_branch
      %17 = sbr.rel (%p15) target = $region8
    $region5: #{tpu_custom_call.1} parent=1 // loop_body
      %s19 = ssub.s32 %s14, 1
      %s20 = ssub.s32 %s14, 2
      %s21 = sadd.s32 %s14, 1
      %s22 = ssub.s32 %s14, %s21
      %p23 = scmp.eq.s32.totalorder %s22, 0
      %s25 = sadd.s32 %s24, 1
      %s26 = scalar_select %p23, %s24, %s25
      %p29 = pneg %p23
      %p30 = scmp.eq.s32.totalorder %s14, 1
      %p31 = por %p29, %p30
      %p32 = scmp.ne.s32.totalorder %s24, %s27
      %p33 = scmp.eq.s32.totalorder %s14, 0
      %p34 = por %p32, %p33
      %p35 = scmp.ne.s32.totalorder %s24, %s27
      %p36 = scmp.eq.s32.totalorder %s19, 1
      %p37 = por %p35, %p36
      %p38 = scmp.ne.s32.totalorder %s27, %s28
      %p39 = scmp.eq.s32.totalorder %s19, 0
      %p40 = por %p38, %p39
      %p41 = scmp.ne.s32.totalorder %s27, %s28
      %p42 = scmp.eq.s32.totalorder %s20, 1
      %p43 = por %p41, %p42
      %p45 = scmp.ne.s32.totalorder %s28, %s44
      %p46 = scmp.eq.s32.totalorder %s20, 0
      %p47 = por %p45, %p46
      %s48 = ssub.s32 %s14, %s21
      %p49 = scmp.eq.s32.totalorder %s48, 0
      %s51 = sadd.s32 %s50, 1
      %s52 = scalar_select %p49, %s50, %s51
      %p55 = pneg %p49
      %p56 = scmp.eq.s32.totalorder %s14, 1
      %p57 = por %p55, %p56
      %p58 = scmp.ne.s32.totalorder %s50, %s53
      %p59 = scmp.eq.s32.totalorder %s14, 0
      %p60 = por %p58, %p59
      %p61 = scmp.ne.s32.totalorder %s50, %s53
      %p62 = scmp.eq.s32.totalorder %s19, 1
      %p63 = por %p61, %p62
      %p64 = scmp.ne.s32.totalorder %s53, %s54
      %p65 = scmp.eq.s32.totalorder %s19, 0
      %p66 = por %p64, %p65
      %p67 = scmp.ne.s32.totalorder %s53, %s54
      %p68 = scmp.eq.s32.totalorder %s20, 1
      %p69 = por %p67, %p68
      %p71 = scmp.ne.s32.totalorder %s54, %s70
      %p72 = scmp.eq.s32.totalorder %s20, 0
      %p73 = por %p71, %p72
      %s74 = ssub.s32 %s14, %s21
      %p75 = scmp.eq.s32.totalorder %s74, 0
      %s77 = sadd.s32 %s76, 1
      %s78 = scalar_select %p75, %s76, %s77
      %p81 = pneg %p75
      %p82 = scmp.eq.s32.totalorder %s14, 1
      %p83 = por %p81, %p82
      %p84 = scmp.ne.s32.totalorder %s76, %s79
      %p85 = scmp.eq.s32.totalorder %s14, 0
      %p86 = por %p84, %p85
      %p87 = scmp.ne.s32.totalorder %s76, %s79
      %p88 = scmp.eq.s32.totalorder %s19, 1
      %p89 = por %p87, %p88
      %p90 = scmp.ne.s32.totalorder %s79, %s80
      %p91 = scmp.eq.s32.totalorder %s19, 0
      %p92 = por %p90, %p91
      %p93 = scmp.ne.s32.totalorder %s79, %s80
      %p94 = scmp.eq.s32.totalorder %s20, 1
      %p95 = por %p93, %p94
      %p97 = scmp.ne.s32.totalorder %s80, %s96
      %p98 = scmp.eq.s32.totalorder %s20, 0
      %p99 = por %p97, %p98
      %p100 = scmp.le.s32.totalorder 1, %s14
      %p101 = scmp.lt.s32.totalorder %s14, 3
      %p102 = pnand %p100, %p101
      %p103 = pneg %p102
      // Predicated region
      $region9: #{tpu_custom_call.1} parent=5 // pred_check
        _
      $region10: #{tpu_custom_call.1} parent=5 // pred_check_branch
        %105 = sbr.rel (%p102) target = $region12
      $region11: #{tpu_custom_call.1} parent=5 // pred_region
        %s106 = ssub.s32 %s14, 1
      $region12: #{tpu_custom_call.1} parent=5 // pred_fallthru
        _
      %p107 = scmp.lt.s32.totalorder %s14, 2
      // Predicated region
      $region13: #{tpu_custom_call.1} parent=5 // pred_check
        %p108 = pneg %p107
      $region14: #{tpu_custom_call.1} parent=5 // pred_check_branch
        %110 = sbr.rel (%p108) target = $region16
      $region15: #{tpu_custom_call.1} parent=5 // pred_region
        // Predicated region
        $region17: #{tpu_custom_call.1} parent=15 // pred_check
          %p111 = pneg %p34
        $region18: #{tpu_custom_call.1} parent=15 // pred_check_branch
          %113 = sbr.rel (%p111) target = $region20
        $region19: #{tpu_custom_call.1} parent=15 // pred_region
          %s114 = sand.u32 %s24, 1
          %s115 = scalar_lea.sflag [#allocation3], %s114
          %s116 = sand.u32 %s24, 1
          %s117 = smul.addr %s116, 8
          %s118 = scalar_lea.vmem [#allocation2], %s117
          %s120 = ssub.s32 128, 128
          %121 = vsyncadd %s115, %s120
          %s122 = smul.addr %s14, 2
          %s123 = smul.addr %s122, 64
          %s124 = scalar_lea.hbm %s0, %s123
          %s126 = sshll.u32 %s118, 4
          %s127 = int_to_ptr.vmem [resolvable:$true] %s126
          %129 = dma.hbm_to_vmem [thread:$0]  %s124, 128, %s127, %s115
        $region20: #{tpu_custom_call.1} parent=15 // pred_fallthru
          _
        // Predicated region
        $region21: #{tpu_custom_call.1} parent=15 // pred_check
          %p130 = pneg %p60
        $region22: #{tpu_custom_call.1} parent=15 // pred_check_branch
          %132 = sbr.rel (%p130) target = $region24
        $region23: #{tpu_custom_call.1} parent=15 // pred_region
          %s133 = sand.u32 %s50, 1
          %s134 = scalar_lea.sflag [#allocation5], %s133
          %s135 = sand.u32 %s50, 1
          %s136 = smul.addr %s135, 2
          %s137 = scalar_lea.vmem [#allocation4], %s136
          %s139 = ssub.s32 32, 32
          %140 = vsyncadd %s134, %s139
          %s141 = smul.addr %s14, 2
          %s142 = smul.addr %s141, 16
          %s143 = scalar_lea.hbm %s1, %s142
          %s145 = sshll.u32 %s137, 4
          %s146 = int_to_ptr.vmem [resolvable:$true] %s145
          %148 = dma.hbm_to_vmem [thread:$0]  %s143, 32, %s146, %s134
        $region24: #{tpu_custom_call.1} parent=15 // pred_fallthru
          _
      $region16: #{tpu_custom_call.1} parent=5 // pred_fallthru
        _
      %p149 = scmp.le.s32.totalorder 1, %s14
      %p150 = scmp.lt.s32.totalorder %s14, 3
      %p151 = pnand %p149, %p150
      %p152 = pneg %p151
      // Predicated region
      $region25: #{tpu_custom_call.1} parent=5 // pred_check
        _
      $region26: #{tpu_custom_call.1} parent=5 // pred_check_branch
        %154 = sbr.rel (%p151) target = $region28
      $region27: #{tpu_custom_call.1} parent=5 // pred_region
        %s155 = ssub.s32 %s14, 1
        %s156 = sand.u32 %s27, 1
        %s157 = scalar_lea.sflag [#allocation3], %s156
        %s158 = sand.u32 %s27, 1
        %s159 = smul.addr %s158, 8
        %s160 = scalar_lea.vmem [#allocation2], %s159
        // Predicated region
        $region29: #{tpu_custom_call.1} parent=27 // pred_check
          %p161 = pneg %p40
        $region30: #{tpu_custom_call.1} parent=27 // pred_check_branch
          %163 = sbr.rel (%p161) target = $region32
        $region31: #{tpu_custom_call.1} parent=27 // pred_region
          %164 = dma.done %s157, 128
        $region32: #{tpu_custom_call.1} parent=27 // pred_fallthru
          _
        %s165 = sand.u32 %s53, 1
        %s166 = scalar_lea.sflag [#allocation5], %s165
        %s167 = sand.u32 %s53, 1
        %s168 = smul.addr %s167, 2
        %s169 = scalar_lea.vmem [#allocation4], %s168
        // Predicated region
        $region33: #{tpu_custom_call.1} parent=27 // pred_check
          %p170 = pneg %p66
        $region34: #{tpu_custom_call.1} parent=27 // pred_check_branch
          %172 = sbr.rel (%p170) target = $region36
        $region35: #{tpu_custom_call.1} parent=27 // pred_region
          %173 = dma.done %s166, 32
        $region36: #{tpu_custom_call.1} parent=27 // pred_fallthru
          _
        %s174 = sand.u32 %s27, 1
        %s175 = scalar_lea.sflag [#allocation3], %s174
        %s176 = sand.u32 %s27, 1
        %s177 = smul.addr %s176, 8
        %s178 = scalar_lea.vmem [#allocation2], %s177
        %p179 = pneg %p40
        %p180 = pneg %p37
        %s181 = sand.u32 %s53, 1
        %s182 = scalar_lea.sflag [#allocation5], %s181
        %s183 = sand.u32 %s53, 1
        %s184 = smul.addr %s183, 2
        %s185 = scalar_lea.vmem [#allocation4], %s184
        %p186 = pneg %p66
        %p187 = pneg %p63
        %p188 = pneg %p92
        %p189 = pneg %p89
        %p190 = scmp.lt.s32.totalorder %s19, 1
        %s191 = scalar_select %p190, %s19, 1
        %s192 = smul.addr %s191, 4
        %s193 = scalar_lea.vmem %s2, %s192
        %p194 = scmp.lt.s32.totalorder %s19, 1
        %s195 = scalar_select %p194, %s19, 1
        %s196 = smul.addr %s195, 4
        %s197 = scalar_lea.vmem %s2, %s196
        %v198 = vld [vmem:[%s160] sm:$0xff]
        %v199 = vld [vmem:[%s169] sm:$0x3]
        %v201 = vcombine.high %v198, %v198
        %vm203 = vcmask 1043456
        %v204 = vsel %vm203, %v198, -inf
        %v205 = vrot.slane %v204, 4
        %v206 = vmax.f32 %v204, %v205
        %v207 = vrot.slane %v206, 2
        %v208 = vmax.f32 %v206, %v207
        %v209 = vrot.slane %v208, 1
        %v210 = vmax.f32 %v208, %v209
        %v211 = vsel %vm203, %v201, -inf
        %v212 = vrot.slane %v211, 4
        %v213 = vmax.f32 %v211, %v212
        %v214 = vrot.slane %v213, 2
        %v215 = vmax.f32 %v213, %v214
        %v216 = vrot.slane %v215, 1
        %v217 = vmax.f32 %v215, %v216
        %v220 = vcombine.low %v210, %v217
        %v222 = vsub.f32 %v198, %v220
        %v223 = vmul.f32 %v222, 1.442695
        %v224 = vpow.pop %v223
        %v226 = vcombine.high %v224, %v224
        %v228 = vsel %vm203, %v224, 0.0
        %v229 = vrot.slane %v228, 4
        %v230 = vadd.f32 %v228, %v229
        %v231 = vrot.slane %v230, 2
        %v232 = vadd.f32 %v230, %v231
        %v233 = vrot.slane %v232, 1
        %v234 = vadd.f32 %v232, %v233
        %v235 = vsel %vm203, %v226, 0.0
        %v236 = vrot.slane %v235, 4
        %v237 = vadd.f32 %v235, %v236
        %v238 = vrot.slane %v237, 2
        %v239 = vadd.f32 %v237, %v238
        %v240 = vrot.slane %v239, 1
        %v241 = vadd.f32 %v239, %v240
        %v244 = vcombine.low %v234, %v241
        %v246 = vrcp.pop %v244
        %v247 = vmul.f32 %v224, %v246
        %v248 = vlaneseq
        %v249 = vshrl.u32 %v248, 7
        %v250 = vlaneseq
        %v251 = vshrl.u32 %v250, 7
        %v252 = vsub.s32 0, %v251
        %v253 = vrot.slane %v199, %v252
        %v254 = vlaneseq
        %v255 = vshrl.u32 %v254, 7
        %v256 = vsub.s32 1, %v255
        %v257 = vrot.slane %v199, %v256
        %vm258 = vcmp.eq.s32.totalorder %v249, %v253
        %vm259 = vcmp.eq.s32.totalorder %v249, %v257
        %v260 = vsel %vm258, 1, 0
        %v261 = vsel %vm259, 1, 0
        %v262 = vcvt.s32.f32 %v260
        %v263 = vcvt.s32.f32 %v261
        %vm264 = vcmp.ge.s32.totalorder %v199, 0
        %v265 = vsel %vm264, 1, 0
        %v266 = vcvt.s32.f32 %v265
        %v268 = vlaneseq
        %v269 = vshrl.u32 %v268, 7
        %v270 = vsub.s32 0, %v269
        %v271 = vrot.slane %v266, %v270
        %v272 = vlaneseq
        %v273 = vshrl.u32 %v272, 7
        %v274 = vsub.s32 1, %v273
        %v275 = vrot.slane %v266, %v274
        %v276 = vcombine.low %v271, %v275
        %v278 = vmul.f32 %v247, %v276
        %v281 = vcombine.low %v262, %v263
        %v283 = vmul.f32 %v278, %v281
        %v285 = vcombine.high %v283, %v283
        %v287 = vsel %vm203, %v283, 0.0
        %v288 = vsel %vm203, %v285, 0.0
        %v289 = vadd.f32 %v287, %v288
        %290 = vadd.xlane.f32.xlu0 %v289
        %v291 = vpop.xlane.xlu0 %290
        %v292 = vmul.f32 %v278, %v278
        %v294 = vcombine.high %v292, %v292
        %v296 = vsel %vm203, %v292, 0.0
        %v297 = vsel %vm203, %v294, 0.0
        %v298 = vadd.f32 %v296, %v297
        %299 = vadd.xlane.f32.xlu0 %v298
        %v300 = vpop.xlane.xlu0 %299
        %v301 = vsel %vm203, %v262, 0.0
        %v302 = vsel %vm203, %v263, 0.0
        %v303 = vadd.f32 %v301, %v302
        %304 = vadd.xlane.f32.xlu0 %v303
        %v305 = vpop.xlane.xlu0 %304
        %v306 = vadd.f32 %v300, %v305
        %v307 = vsub.f32 %v306, %v291
        %v308 = vadd.f32 %v291, 1e-06
        %v309 = vadd.f32 %v307, 1e-06
        %v310 = vrcp.pop %v309
        %v311 = vmul.f32 %v308, %v310
        %vm312 = vcmask 3072
        %313 = vst.msk [vmem:[%s197] sm:$0xf] %vm312, %v311
        %p314 = scmp.lt.s32.totalorder %s19, 1
        %s315 = scalar_select %p314, %s19, 1
        %s316 = smul.addr %s315, 4
        %s317 = scalar_lea.vmem %s2, %s316
        // Predicated region
        $region37: #{tpu_custom_call.1} parent=27 // pred_check
          %p318 = pneg %p89
        $region38: #{tpu_custom_call.1} parent=27 // pred_check_branch
          %320 = sbr.rel (%p318) target = $region40
        $region39: #{tpu_custom_call.1} parent=27 // pred_region
          _
        $region40: #{tpu_custom_call.1} parent=27 // pred_fallthru
          _
      $region28: #{tpu_custom_call.1} parent=5 // pred_fallthru
        _
      %p321 = scmp.le.s32.totalorder 2, %s14
      // Predicated region
      $region41: #{tpu_custom_call.1} parent=5 // pred_check
        %p322 = pneg %p321
      $region42: #{tpu_custom_call.1} parent=5 // pred_check_branch
        %324 = sbr.rel (%p322) target = $region44
      $region43: #{tpu_custom_call.1} parent=5 // pred_region
        %s325 = ssub.s32 %s14, 2
        // Predicated region
        $region45: #{tpu_custom_call.1} parent=43 // pred_check
          %p326 = pneg %p95
        $region46: #{tpu_custom_call.1} parent=43 // pred_check_branch
          %328 = sbr.rel (%p326) target = $region48
        $region47: #{tpu_custom_call.1} parent=43 // pred_region
          %p329 = scmp.lt.s32.totalorder %s20, 1
          %s330 = scalar_select %p329, %s20, 1
          %s331 = smul.addr %s330, 4
          %s332 = scalar_lea.vmem %s2, %s331
        $region48: #{tpu_custom_call.1} parent=43 // pred_fallthru
          _
      $region44: #{tpu_custom_call.1} parent=5 // pred_fallthru
        _
    $region6: #{tpu_custom_call.1} parent=1 // loop_footer
      %s18 = sadd.s32 1, %s14
    $region7: #{tpu_custom_call.1} parent=1 // loop_footer_branch
      %13 = sbr.rel target = $region3
    $region8: #{tpu_custom_call.1} parent=1 // loop_exit
      _
    %333 = vsyncpa [#allocation3], 1
    %s334 = scalar_lea.sflag [#allocation3], 1
    %335 = vsyncpa %s334, 1
    %336 = vsyncpa [#allocation5], 1
    %s337 = scalar_lea.sflag [#allocation5], 1
    %338 = vsyncpa %s337, 1

</llo_original>
